<compile_context>
chip_gen: v7x
topology: tpu7x:2x2x1
jax: 0.10.0
libtpu: 0.0.40
codegen_flags: <defaults>
</compile_context>

<pallas_src>
import math

import jax
import jax.numpy as jnp
from jax import lax
from jax.experimental import pallas as pl
from jax.experimental.pallas import tpu as pltpu

PHI = (1.0 + math.sqrt(5.0)) / 2.0
LN_EPS = 1e-5


def _gelu(x):
    # TODO(synk): PyTorch nn.GELU() is erf-exact; tanh-approximate GELU is used
    # here to guarantee Mosaic lowering (max abs diff ~1e-3).
    c = math.sqrt(2.0 / math.pi)
    return 0.5 * x * (1.0 + jnp.tanh(c * (x + 0.044715 * x * x * x)))


def _softplus(x):
    # numerically-stable softplus (Mosaic-safe)
    return jnp.maximum(x, 0.0) + jnp.log(1.0 + jnp.exp(-jnp.abs(x)))


def consciousness_expert_kernel(x_ref, w_enc1, w_enc2, w_b1, w_f2, w_head,
                                bias, out_ref):
    H = w_enc1.shape[1]          # hidden_dim
    H2 = w_enc2.shape[1]         # hidden_dim // 2

    x = x_ref[...]                                                   # [TB, E] f32

    # ------------------ consciousness_encoder ------------------
    h = jnp.dot(x.astype(jnp.bfloat16), w_enc1[...],
                preferred_element_type=jnp.float32) + bias[0:1, 0:H]
    h = _gelu(h)
    # fused LayerNorm stats: var = E[x^2] - mu^2
    mu = jnp.mean(h, axis=-1, keepdims=True)
    ms = jnp.mean(h * h, axis=-1, keepdims=True)
    var = ms - mu * mu
    h = (h - mu) * lax.rsqrt(var + LN_EPS) * bias[1:2, 0:H] + bias[2:3, 0:H]
    # Dropout(0.1): inference -> identity
    h2 = _gelu(jnp.dot(h.astype(jnp.bfloat16), w_enc2[...],
                       preferred_element_type=jnp.float32) + bias[3:4, 0:H2])
    # h2: [TB, H2]

    # phi_resonance_detector: dead code (seq_len==1 softmax weights == 1.0,
    # resonance output unused) -> phi_resonance_score is the constant 1.0.

    # --------- branch analyzers, first layers packed into one matmul ---------
    branch1 = jnp.dot(h2.astype(jnp.bfloat16), w_b1[...],
                      preferred_element_type=jnp.float32) + bias[4:5, 0:768]
    f_pre = jnp.tanh(branch1[:, 0:256])            # field_analyzer layer 1
    a_act = jax.nn.sigmoid(branch1[:, 256:512])    # awareness_detector layer 1
    t_act = _gelu(branch1[:, 512:768])             # transcendental layer 1

    # field_analyzer layer 2 (the layer-3 / head linears are folded offline)
    f_act = jnp.maximum(
        jnp.dot(f_pre.astype(jnp.bfloat16), w_f2[...],
                preferred_element_type=jnp.float32) + bias[5:6, 0:128], 0.0)

    # ---- folded heads: one matmul over [f_act | a_act | t_act | h2] ----
    combined = jnp.concatenate([f_act, a_act, t_act, h2], axis=-1)   # [TB, 640+H2]
    logits = jnp.dot(combined.astype(jnp.bfloat16), w_head[...],
                     preferred_element_type=jnp.float32) + bias[6:7, 0:4]

    validity = jax.nn.sigmoid(logits[:, 0:1] * PHI)
    unity = jax.nn.sigmoid(logits[:, 1:2] * PHI)
    consciousness = _softplus(logits[:, 2:3])
    transcendence = jax.nn.sigmoid(logits[:, 3:4])
    uncertainty = 1.0 - validity * unity
    phi_res = jnp.ones_like(validity)                                # exact
    pad = jnp.zeros((validity.shape[0], 2), jnp.float32)

    # single lane-dense store
    out_ref[...] = jnp.concatenate(
        [validity, unity, consciousness, transcendence, phi_res, uncertainty, pad],
        axis=-1)


# ---------------------------------------------------------------------------
# Parameter init (PyTorch nn.Linear-style uniform init) + offline folding/packing.
# ---------------------------------------------------------------------------
def _linear(key, fan_in, fan_out):
    kw, kb = jax.random.split(key)
    bound = 1.0 / math.sqrt(fan_in)
    w = jax.random.uniform(kw, (fan_in, fan_out), jnp.float32, -bound, bound)
    b = jax.random.uniform(kb, (1, fan_out), jnp.float32, -bound, bound)
    return w, b


def init_params(key, embed_dim, hidden_dim):
    h2 = hidden_dim // 2
    keys = jax.random.split(key, 16)
    w_enc1, b_enc1 = _linear(keys[0], embed_dim, hidden_dim)
    ln_g = jnp.ones((1, hidden_dim), jnp.float32)
    ln_b = jnp.zeros((1, hidden_dim), jnp.float32)
    w_enc2, b_enc2 = _linear(keys[1], hidden_dim, h2)
    # (attention params of phi_resonance_detector are dead code -> not created)
    w_f1, b_f1 = _linear(keys[6], h2, 256)
    w_f2, b_f2 = _linear(keys[7], 256, 128)
    w_f3, b_f3 = _linear(keys[8], 128, 64)
    w_a1, b_a1 = _linear(keys[9], h2, 256)
    w_a2, b_a2 = _linear(keys[10], 256, 64)
    w_t1, b_t1 = _linear(keys[11], h2, 256)
    w_t2, b_t2 = _linear(keys[12], 256, 32)
    w_m, b_m = _linear(keys[13], h2, 16)
    # four independent Linear(176, 1) heads, packed as [176, 4]
    head_ws, head_bs = [], []
    for hk in jax.random.split(keys[14], 4):
        w, b = _linear(hk, 64 + 64 + 32 + 16, 1)
        head_ws.append(w)
        head_bs.append(b)
    w_heads = jnp.concatenate(head_ws, axis=-1)   # [176, 4]
    b_h = jnp.concatenate(head_bs, axis=-1)       # [1, 4]
    wh_f, wh_a, wh_t, wh_m = (w_heads[0:64], w_heads[64:128],
                              w_heads[128:160], w_heads[160:176])

    # ---- exact folding: last branch linears into the heads ----
    w_f3h = w_f3 @ wh_f                           # [128, 4]
    w_a2h = w_a2 @ wh_a                           # [256, 4]
    w_t2h = w_t2 @ wh_t                           # [256, 4]
    w_mh = w_m @ wh_m                             # [h2, 4]
    b_logits = (b_h + b_f3 @ wh_f + b_a2 @ wh_a + b_t2 @ wh_t + b_m @ wh_m)  # [1,4]

    # ---- packing into slabs ----
    w_b1 = jnp.concatenate([w_f1, w_a1, w_t1], axis=1)               # [h2, 768]
    b_b1 = jnp.concatenate([b_f1, b_a1, b_t1], axis=1)               # [1, 768]
    w_head = jnp.concatenate([w_f3h, w_a2h, w_t2h, w_mh], axis=0)    # [640+h2, 4]

    W = max(hidden_dim, 768)
    bias_slab = jnp.zeros((8, W), jnp.float32)
    bias_slab = bias_slab.at[0, :hidden_dim].set(b_enc1[0])
    bias_slab = bias_slab.at[1, :hidden_dim].set(ln_g[0])
    bias_slab = bias_slab.at[2, :hidden_dim].set(ln_b[0])
    bias_slab = bias_slab.at[3, :h2].set(b_enc2[0])
    bias_slab = bias_slab.at[4, :768].set(b_b1[0])
    bias_slab = bias_slab.at[5, :128].set(b_f2[0])
    bias_slab = bias_slab.at[6, :4].set(b_logits[0])

    bf16 = jnp.bfloat16
    return (w_enc1.astype(bf16), w_enc2.astype(bf16), w_b1.astype(bf16),
            w_f2.astype(bf16), w_head.astype(bf16), bias_slab)


# ---------------------------------------------------------------------------
# Wrapper
# ---------------------------------------------------------------------------
def consciousness_expert_forward(proof_embedding, params, *, batch_tile=256):
    w_enc1, w_enc2, w_b1, w_f2, w_head, bias_slab = params
    B, E = proof_embedding.shape
    # batch tile: full (rounded-up) batch if small, else pipelined tiles
    TB = batch_tile if B >= batch_tile else ((B + 7) // 8) * 8
    Bp = pl.cdiv(B, TB) * TB
    x_pad = jnp.zeros((Bp, E), jnp.float32).at[:B].set(
        proof_embedding.astype(jnp.float32))

    const = lambda i: (0, 0)
    out = pl.pallas_call(
        consciousness_expert_kernel,
        out_shape=jax.ShapeDtypeStruct((Bp, 8), jnp.float32),
        grid=(Bp // TB,),
        in_specs=[
            pl.BlockSpec((TB, E), lambda i: (i, 0)),
            pl.BlockSpec(w_enc1.shape, const),
            pl.BlockSpec(w_enc2.shape, const),
            pl.BlockSpec(w_b1.shape, const),
            pl.BlockSpec(w_f2.shape, const),
            pl.BlockSpec(w_head.shape, const),
            pl.BlockSpec(bias_slab.shape, const),
        ],
        out_specs=pl.BlockSpec((TB, 8), lambda i: (i, 0)),
        compiler_params=pltpu.CompilerParams(
            dimension_semantics=("parallel",)),
    )(x_pad, w_enc1, w_enc2, w_b1, w_f2, w_head, bias_slab)
    return out[:B]


if __name__ == "__main__":
    EMBED_DIM, HIDDEN_DIM, BATCH = 64, 128, 2      # small, forward-consistent shapes
    key = jax.random.PRNGKey(0)
    pkey, xkey = jax.random.split(key)
    params = init_params(pkey, EMBED_DIM, HIDDEN_DIM)
    proof_embedding = jax.random.normal(xkey, (BATCH, EMBED_DIM), dtype=jnp.float32)

    out = jax.block_until_ready(consciousness_expert_forward(proof_embedding, params))

    row = out[0]
    validity_confidence = float(row[0])
    unity_confidence = float(row[1])
    consciousness_score = float(row[2])
    transcendence_potential = float(row[3])
    phi_resonance_score = float(row[4])
    uncertainty_estimate = float(row[5])

    # Host-side ExpertPrediction assembly (mirrors the reference forward's Python logic)
    mathematical_errors = []
    if validity_confidence < 0.85:
        mathematical_errors.append("Insufficient consciousness mathematical rigor")
    if phi_resonance_score < 0.7:
        mathematical_errors.append("Weak φ-harmonic resonance integration")
    if consciousness_score < 1.0:
        mathematical_errors.append("Inadequate consciousness field development")
    if transcendence_potential < 0.6:
        mathematical_errors.append("Limited transcendental mathematical content")
    improvement_suggestions = []
    if phi_resonance_score < 0.8:
        improvement_suggestions.append("Strengthen φ-harmonic mathematical foundations")
    if consciousness_score < 2.0:
        improvement_suggestions.append("Deepen consciousness field integration")
    if transcendence_potential < 0.8:
        improvement_suggestions.append("Enhance transcendental unity demonstrations")

    prediction = dict(
        expert_type="consciousness_mathematics_expert",
        validity_confidence=max(0.0, min(1.0, validity_confidence)),
        unity_confidence=max(0.0, min(1.0, unity_confidence)),
        phi_resonance_score=max(0.0, min(1.0, phi_resonance_score)),
        consciousness_score=max(0.0, consciousness_score),
        uncertainty_estimate=max(0.0, min(1.0, uncertainty_estimate)),
        reasoning_steps=[
            "1. Analyzed consciousness field equation C(x,y,t) = φ*sin(x*φ)*cos(y*φ)*e^(-t/φ)",
            "2. Validated φ-harmonic resonance patterns in proof structure",
            "3. Verified awareness dynamics and consciousness integration",
            "4. Checked meta-recursive self-reference patterns",
            f"5. Measured consciousness score: {consciousness_score:.4f}",
            f"6. Assessed transcendence potential: {transcendence_potential:.4f}",
            "7. Confirmed 11-dimensional consciousness space consistency",
        ],
        mathematical_errors=mathematical_errors,
        improvement_suggestions=improvement_suggestions,
        computational_cost=0.12,
    )
    assert 0.0 <= prediction["validity_confidence"] <= 1.0
    assert prediction["phi_resonance_score"] == 1.0
    assert out.shape == (BATCH, 8)
    assert bool(jnp.all(jnp.isfinite(out)))
    print("KERNEL_OK")
</pallas_src>

<mosaic_0001>
module attributes {stable_mosaic.version = 11 : i64} {
  func.func @consciousness_expert_kernel(%arg0: i32, %arg1: memref<8x64xf32, #tpu.memory_space<vmem>>, %arg2: memref<64x128xbf16, #tpu.memory_space<vmem>>, %arg3: memref<128x64xbf16, #tpu.memory_space<vmem>>, %arg4: memref<64x768xbf16, #tpu.memory_space<vmem>>, %arg5: memref<256x128xbf16, #tpu.memory_space<vmem>>, %arg6: memref<704x4xbf16, #tpu.memory_space<vmem>>, %arg7: memref<8x768xf32, #tpu.memory_space<vmem>>, %arg8: memref<8x8xf32, #tpu.memory_space<vmem>>) attributes {dimension_semantics = [#tpu.dimension_semantics<parallel>], iteration_bounds = array<i64: 1>, scalar_prefetch = 0 : i64, scratch_operands = 0 : i64, tpu.core_type = #tpu.core_type<tc>, window_params = [{transform_indices = @transform_0, window_bounds = array<i64: 8, 64>}, {pipeline_mode = #tpu.pipeline_mode<synchronous>, transform_indices = @transform_1, window_bounds = array<i64: 64, 128>}, {pipeline_mode = #tpu.pipeline_mode<synchronous>, transform_indices = @transform_2, window_bounds = array<i64: 128, 64>}, {pipeline_mode = #tpu.pipeline_mode<synchronous>, transform_indices = @transform_3, window_bounds = array<i64: 64, 768>}, {pipeline_mode = #tpu.pipeline_mode<synchronous>, transform_indices = @transform_4, window_bounds = array<i64: 256, 128>}, {pipeline_mode = #tpu.pipeline_mode<synchronous>, transform_indices = @transform_5, window_bounds = array<i64: 704, 4>}, {pipeline_mode = #tpu.pipeline_mode<synchronous>, transform_indices = @transform_6, window_bounds = array<i64: 8, 768>}, {transform_indices = @transform_7, window_bounds = array<i64: 8, 8>}]} {
    %c0 = arith.constant 0 : index
    %c0_0 = arith.constant 0 : index
    %0 = vector.load %arg1[%c0, %c0_0] : memref<8x64xf32, #tpu.memory_space<vmem>>, vector<8x64xf32>
    %1 = arith.truncf %0 : vector<8x64xf32> to vector<8x64xbf16>
    %c0_1 = arith.constant 0 : index
    %c0_2 = arith.constant 0 : index
    %2 = vector.load %arg2[%c0_1, %c0_2] : memref<64x128xbf16, #tpu.memory_space<vmem>>, vector<64x128xbf16>
    %cst = arith.constant dense<0.000000e+00> : vector<8x128xf32>
    %3 = tpu.matmul %1, %2, %cst {dimension_numbers = #tpu.dot_dimension_numbers<[1], [0], [0], [1], [0, 0, 1, 1], [], []>} : vector<8x64xbf16>, vector<64x128xbf16>, vector<8x128xf32> -> vector<8x128xf32>
    %c0_3 = arith.constant 0 : index
    %c0_4 = arith.constant 0 : index
    %4 = vector.load %arg7[%c0_3, %c0_4] : memref<8x768xf32, #tpu.memory_space<vmem>>, vector<1x128xf32>
    %5 = vector.broadcast %4 : vector<1x128xf32> to vector<8x128xf32>
    %6 = arith.addf %3, %5 : vector<8x128xf32>
    %cst_5 = arith.constant 5.000000e-01 : f32
    %7 = vector.broadcast %cst_5 : f32 to vector<8x128xf32>
    %8 = arith.mulf %7, %6 : vector<8x128xf32>
    %cst_6 = arith.constant 4.471500e-02 : f32
    %9 = vector.broadcast %cst_6 : f32 to vector<8x128xf32>
    %10 = arith.mulf %9, %6 : vector<8x128xf32>
    %11 = arith.mulf %10, %6 : vector<8x128xf32>
    %12 = arith.mulf %11, %6 : vector<8x128xf32>
    %13 = arith.addf %6, %12 : vector<8x128xf32>
    %cst_7 = arith.constant 0.797884583 : f32
    %14 = vector.broadcast %cst_7 : f32 to vector<8x128xf32>
    %15 = arith.mulf %14, %13 : vector<8x128xf32>
    %16 = math.tanh %15 : vector<8x128xf32>
    %cst_8 = arith.constant 1.000000e+00 : f32
    %17 = vector.broadcast %cst_8 : f32 to vector<8x128xf32>
    %18 = arith.addf %17, %16 : vector<8x128xf32>
    %19 = arith.mulf %8, %18 : vector<8x128xf32>
    %cst_9 = arith.constant dense<0.000000e+00> : vector<8xf32>
    %20 = vector.multi_reduction <add>, %19, %cst_9 [1] : vector<8x128xf32> to vector<8xf32>
    %21 = vector.shape_cast %20 : vector<8xf32> to vector<8x1xf32>
    %cst_10 = arith.constant 1.280000e+02 : f32
    %22 = vector.broadcast %cst_10 : f32 to vector<8x1xf32>
    %23 = arith.divf %21, %22 : vector<8x1xf32>
    %24 = arith.mulf %19, %19 : vector<8x128xf32>
    %cst_11 = arith.constant dense<0.000000e+00> : vector<8xf32>
    %25 = vector.multi_reduction <add>, %24, %cst_11 [1] : vector<8x128xf32> to vector<8xf32>
    %26 = vector.shape_cast %25 : vector<8xf32> to vector<8x1xf32>
    %cst_12 = arith.constant 1.280000e+02 : f32
    %27 = vector.broadcast %cst_12 : f32 to vector<8x1xf32>
    %28 = arith.divf %26, %27 : vector<8x1xf32>
    %29 = arith.mulf %23, %23 : vector<8x1xf32>
    %30 = arith.subf %28, %29 : vector<8x1xf32>
    %31 = vector.broadcast %23 : vector<8x1xf32> to vector<8x128xf32>
    %32 = arith.subf %19, %31 : vector<8x128xf32>
    %cst_13 = arith.constant 9.99999974E-6 : f32
    %33 = vector.broadcast %cst_13 : f32 to vector<8x1xf32>
    %34 = arith.addf %30, %33 : vector<8x1xf32>
    %35 = math.rsqrt %34 : vector<8x1xf32>
    %36 = vector.broadcast %35 : vector<8x1xf32> to vector<8x128xf32>
    %37 = arith.mulf %32, %36 : vector<8x128xf32>
    %c1 = arith.constant 1 : index
    %c0_14 = arith.constant 0 : index
    %38 = vector.load %arg7[%c1, %c0_14] : memref<8x768xf32, #tpu.memory_space<vmem>>, vector<1x128xf32>
    %39 = vector.broadcast %38 : vector<1x128xf32> to vector<8x128xf32>
    %40 = arith.mulf %37, %39 : vector<8x128xf32>
    %c2 = arith.constant 2 : index
    %c0_15 = arith.constant 0 : index
    %41 = vector.load %arg7[%c2, %c0_15] : memref<8x768xf32, #tpu.memory_space<vmem>>, vector<1x128xf32>
    %42 = vector.broadcast %41 : vector<1x128xf32> to vector<8x128xf32>
    %43 = arith.addf %40, %42 : vector<8x128xf32>
    %44 = arith.truncf %43 : vector<8x128xf32> to vector<8x128xbf16>
    %c0_16 = arith.constant 0 : index
    %c0_17 = arith.constant 0 : index
    %45 = vector.load %arg3[%c0_16, %c0_17] : memref<128x64xbf16, #tpu.memory_space<vmem>>, vector<128x64xbf16>
    %cst_18 = arith.constant dense<0.000000e+00> : vector<8x64xf32>
    %46 = tpu.matmul %44, %45, %cst_18 {dimension_numbers = #tpu.dot_dimension_numbers<[1], [0], [0], [1], [0, 0, 1, 1], [], []>} : vector<8x128xbf16>, vector<128x64xbf16>, vector<8x64xf32> -> vector<8x64xf32>
    %c3 = arith.constant 3 : index
    %c0_19 = arith.constant 0 : index
    %47 = vector.load %arg7[%c3, %c0_19] : memref<8x768xf32, #tpu.memory_space<vmem>>, vector<1x64xf32>
    %48 = vector.broadcast %47 : vector<1x64xf32> to vector<8x64xf32>
    %49 = arith.addf %46, %48 : vector<8x64xf32>
    %cst_20 = arith.constant 5.000000e-01 : f32
    %50 = vector.broadcast %cst_20 : f32 to vector<8x64xf32>
    %51 = arith.mulf %50, %49 : vector<8x64xf32>
    %cst_21 = arith.constant 4.471500e-02 : f32
    %52 = vector.broadcast %cst_21 : f32 to vector<8x64xf32>
    %53 = arith.mulf %52, %49 : vector<8x64xf32>
    %54 = arith.mulf %53, %49 : vector<8x64xf32>
    %55 = arith.mulf %54, %49 : vector<8x64xf32>
    %56 = arith.addf %49, %55 : vector<8x64xf32>
    %cst_22 = arith.constant 0.797884583 : f32
    %57 = vector.broadcast %cst_22 : f32 to vector<8x64xf32>
    %58 = arith.mulf %57, %56 : vector<8x64xf32>
    %59 = math.tanh %58 : vector<8x64xf32>
    %cst_23 = arith.constant 1.000000e+00 : f32
    %60 = vector.broadcast %cst_23 : f32 to vector<8x64xf32>
    %61 = arith.addf %60, %59 : vector<8x64xf32>
    %62 = arith.mulf %51, %61 : vector<8x64xf32>
    %63 = arith.truncf %62 : vector<8x64xf32> to vector<8x64xbf16>
    %c0_24 = arith.constant 0 : index
    %c0_25 = arith.constant 0 : index
    %64 = vector.load %arg4[%c0_24, %c0_25] : memref<64x768xbf16, #tpu.memory_space<vmem>>, vector<64x768xbf16>
    %cst_26 = arith.constant dense<0.000000e+00> : vector<8x768xf32>
    %65 = tpu.matmul %63, %64, %cst_26 {dimension_numbers = #tpu.dot_dimension_numbers<[1], [0], [0], [1], [0, 0, 1, 1], [], []>} : vector<8x64xbf16>, vector<64x768xbf16>, vector<8x768xf32> -> vector<8x768xf32>
    %c4 = arith.constant 4 : index
    %c0_27 = arith.constant 0 : index
    %66 = vector.load %arg7[%c4, %c0_27] : memref<8x768xf32, #tpu.memory_space<vmem>>, vector<1x768xf32>
    %67 = vector.broadcast %66 : vector<1x768xf32> to vector<8x768xf32>
    %68 = arith.addf %65, %67 : vector<8x768xf32>
    %69 = vector.extract_strided_slice %68 {offsets = [0, 0], sizes = [8, 256], strides = [1, 1]} : vector<8x768xf32> to vector<8x256xf32>
    %70 = math.tanh %69 : vector<8x256xf32>
    %71 = vector.extract_strided_slice %68 {offsets = [0, 256], sizes = [8, 256], strides = [1, 1]} : vector<8x768xf32> to vector<8x256xf32>
    %72 = arith.negf %71 : vector<8x256xf32>
    %73 = math.exp %72 : vector<8x256xf32>
    %cst_28 = arith.constant 1.000000e+00 : f32
    %74 = vector.broadcast %cst_28 : f32 to vector<8x256xf32>
    %75 = arith.addf %74, %73 : vector<8x256xf32>
    %76 = arith.divf %74, %75 : vector<8x256xf32>
    %77 = vector.extract_strided_slice %68 {offsets = [0, 512], sizes = [8, 256], strides = [1, 1]} : vector<8x768xf32> to vector<8x256xf32>
    %cst_29 = arith.constant 5.000000e-01 : f32
    %78 = vector.broadcast %cst_29 : f32 to vector<8x256xf32>
    %79 = arith.mulf %78, %77 : vector<8x256xf32>
    %cst_30 = arith.constant 4.471500e-02 : f32
    %80 = vector.broadcast %cst_30 : f32 to vector<8x256xf32>
    %81 = arith.mulf %80, %77 : vector<8x256xf32>
    %82 = arith.mulf %81, %77 : vector<8x256xf32>
    %83 = arith.mulf %82, %77 : vector<8x256xf32>
    %84 = arith.addf %77, %83 : vector<8x256xf32>
    %cst_31 = arith.constant 0.797884583 : f32
    %85 = vector.broadcast %cst_31 : f32 to vector<8x256xf32>
    %86 = arith.mulf %85, %84 : vector<8x256xf32>
    %87 = math.tanh %86 : vector<8x256xf32>
    %cst_32 = arith.constant 1.000000e+00 : f32
    %88 = vector.broadcast %cst_32 : f32 to vector<8x256xf32>
    %89 = arith.addf %88, %87 : vector<8x256xf32>
    %90 = arith.mulf %79, %89 : vector<8x256xf32>
    %91 = arith.truncf %70 : vector<8x256xf32> to vector<8x256xbf16>
    %c0_33 = arith.constant 0 : index
    %c0_34 = arith.constant 0 : index
    %92 = vector.load %arg5[%c0_33, %c0_34] : memref<256x128xbf16, #tpu.memory_space<vmem>>, vector<256x128xbf16>
    %cst_35 = arith.constant dense<0.000000e+00> : vector<8x128xf32>
    %93 = tpu.matmul %91, %92, %cst_35 {dimension_numbers = #tpu.dot_dimension_numbers<[1], [0], [0], [1], [0, 0, 1, 1], [], []>} : vector<8x256xbf16>, vector<256x128xbf16>, vector<8x128xf32> -> vector<8x128xf32>
    %c5 = arith.constant 5 : index
    %c0_36 = arith.constant 0 : index
    %94 = vector.load %arg7[%c5, %c0_36] : memref<8x768xf32, #tpu.memory_space<vmem>>, vector<1x128xf32>
    %95 = vector.broadcast %94 : vector<1x128xf32> to vector<8x128xf32>
    %96 = arith.addf %93, %95 : vector<8x128xf32>
    %cst_37 = arith.constant 0.000000e+00 : f32
    %97 = vector.broadcast %cst_37 : f32 to vector<8x128xf32>
    %98 = arith.maximumf %96, %97 : vector<8x128xf32>
    %99 = tpu.concatenate %98, %76, %90, %62 in 1 : vector<8x128xf32>, vector<8x256xf32>, vector<8x256xf32>, vector<8x64xf32> -> vector<8x704xf32>
    %100 = arith.truncf %99 : vector<8x704xf32> to vector<8x704xbf16>
    %c0_38 = arith.constant 0 : index
    %c0_39 = arith.constant 0 : index
    %101 = vector.load %arg6[%c0_38, %c0_39] : memref<704x4xbf16, #tpu.memory_space<vmem>>, vector<704x4xbf16>
    %cst_40 = arith.constant dense<0.000000e+00> : vector<8x4xf32>
    %102 = tpu.matmul %100, %101, %cst_40 {dimension_numbers = #tpu.dot_dimension_numbers<[1], [0], [0], [1], [0, 0, 1, 1], [], []>} : vector<8x704xbf16>, vector<704x4xbf16>, vector<8x4xf32> -> vector<8x4xf32>
    %c6 = arith.constant 6 : index
    %c0_41 = arith.constant 0 : index
    %103 = vector.load %arg7[%c6, %c0_41] : memref<8x768xf32, #tpu.memory_space<vmem>>, vector<1x4xf32>
    %104 = vector.broadcast %103 : vector<1x4xf32> to vector<8x4xf32>
    %105 = arith.addf %102, %104 : vector<8x4xf32>
    %106 = vector.extract_strided_slice %105 {offsets = [0, 0], sizes = [8, 1], strides = [1, 1]} : vector<8x4xf32> to vector<8x1xf32>
    %cst_42 = arith.constant 1.61803401 : f32
    %107 = vector.broadcast %cst_42 : f32 to vector<8x1xf32>
    %108 = arith.mulf %106, %107 : vector<8x1xf32>
    %109 = arith.negf %108 : vector<8x1xf32>
    %110 = math.exp %109 : vector<8x1xf32>
    %cst_43 = arith.constant 1.000000e+00 : f32
    %111 = vector.broadcast %cst_43 : f32 to vector<8x1xf32>
    %112 = arith.addf %111, %110 : vector<8x1xf32>
    %113 = arith.divf %111, %112 : vector<8x1xf32>
    %114 = vector.extract_strided_slice %105 {offsets = [0, 1], sizes = [8, 1], strides = [1, 1]} : vector<8x4xf32> to vector<8x1xf32>
    %cst_44 = arith.constant 1.61803401 : f32
    %115 = vector.broadcast %cst_44 : f32 to vector<8x1xf32>
    %116 = arith.mulf %114, %115 : vector<8x1xf32>
    %117 = arith.negf %116 : vector<8x1xf32>
    %118 = math.exp %117 : vector<8x1xf32>
    %cst_45 = arith.constant 1.000000e+00 : f32
    %119 = vector.broadcast %cst_45 : f32 to vector<8x1xf32>
    %120 = arith.addf %119, %118 : vector<8x1xf32>
    %121 = arith.divf %119, %120 : vector<8x1xf32>
    %122 = vector.extract_strided_slice %105 {offsets = [0, 2], sizes = [8, 1], strides = [1, 1]} : vector<8x4xf32> to vector<8x1xf32>
    %cst_46 = arith.constant 0.000000e+00 : f32
    %123 = vector.broadcast %cst_46 : f32 to vector<8x1xf32>
    %124 = arith.maximumf %122, %123 : vector<8x1xf32>
    %125 = math.absf %122 : vector<8x1xf32>
    %cst_47 = arith.constant 0.000000e+00 : f32
    %126 = vector.broadcast %cst_47 : f32 to vector<8x1xf32>
    %127 = arith.subf %126, %125 : vector<8x1xf32>
    %128 = math.exp %127 : vector<8x1xf32>
    %cst_48 = arith.constant 1.000000e+00 : f32
    %129 = vector.broadcast %cst_48 : f32 to vector<8x1xf32>
    %130 = arith.addf %129, %128 : vector<8x1xf32>
    %131 = math.log %130 : vector<8x1xf32>
    %132 = arith.addf %124, %131 : vector<8x1xf32>
    %133 = vector.extract_strided_slice %105 {offsets = [0, 3], sizes = [8, 1], strides = [1, 1]} : vector<8x4xf32> to vector<8x1xf32>
    %134 = arith.negf %133 : vector<8x1xf32>
    %135 = math.exp %134 : vector<8x1xf32>
    %cst_49 = arith.constant 1.000000e+00 : f32
    %136 = vector.broadcast %cst_49 : f32 to vector<8x1xf32>
    %137 = arith.addf %136, %135 : vector<8x1xf32>
    %138 = arith.divf %136, %137 : vector<8x1xf32>
    %139 = arith.mulf %113, %121 : vector<8x1xf32>
    %cst_50 = arith.constant 1.000000e+00 : f32
    %140 = vector.broadcast %cst_50 : f32 to vector<8x1xf32>
    %141 = arith.subf %140, %139 : vector<8x1xf32>
    %cst_51 = arith.constant 1.000000e+00 : f32
    %142 = vector.broadcast %cst_51 : f32 to vector<8x1xf32>
    %cst_52 = arith.constant 0.000000e+00 : f32
    %143 = vector.broadcast %cst_52 : f32 to vector<8x2xf32>
    %144 = tpu.concatenate %113, %121, %132, %138, %142, %141, %143 in 1 : vector<8x1xf32>, vector<8x1xf32>, vector<8x1xf32>, vector<8x1xf32>, vector<8x1xf32>, vector<8x1xf32>, vector<8x2xf32> -> vector<8x8xf32>
    %c0_53 = arith.constant 0 : index
    %c0_54 = arith.constant 0 : index
    %145 = vector.load %arg8[%c0_53, %c0_54] : memref<8x8xf32, #tpu.memory_space<vmem>>, vector<8x8xf32>
    tpu.vector_store %arg8[%c0_53, %c0_54], %144 {strides = array<i32>} : memref<8x8xf32, #tpu.memory_space<vmem>>, vector<8x8xf32>,
    return
  }
  func.func @transform_0(%arg0: i32) -> (i32, i32) {
    %c0_i32 = arith.constant 0 : i32
    %c0_i32_0 = arith.constant 0 : i32
    return %arg0, %c0_i32 : i32, i32
  }
  func.func @transform_1(%arg0: i32) -> (i32, i32) {
    %c0_i32 = arith.constant 0 : i32
    %c0_i32_0 = arith.constant 0 : i32
    %c0_i32_1 = arith.constant 0 : i32
    return %c0_i32, %c0_i32_0 : i32, i32
  }
  func.func @transform_2(%arg0: i32) -> (i32, i32) {
    %c0_i32 = arith.constant 0 : i32
    %c0_i32_0 = arith.constant 0 : i32
    %c0_i32_1 = arith.constant 0 : i32
    return %c0_i32, %c0_i32_0 : i32, i32
  }
  func.func @transform_3(%arg0: i32) -> (i32, i32) {
    %c0_i32 = arith.constant 0 : i32
    %c0_i32_0 = arith.constant 0 : i32
    %c0_i32_1 = arith.constant 0 : i32
    return %c0_i32, %c0_i32_0 : i32, i32
  }
  func.func @transform_4(%arg0: i32) -> (i32, i32) {
    %c0_i32 = arith.constant 0 : i32
    %c0_i32_0 = arith.constant 0 : i32
    %c0_i32_1 = arith.constant 0 : i32
    return %c0_i32, %c0_i32_0 : i32, i32
  }
  func.func @transform_5(%arg0: i32) -> (i32, i32) {
    %c0_i32 = arith.constant 0 : i32
    %c0_i32_0 = arith.constant 0 : i32
    %c0_i32_1 = arith.constant 0 : i32
    return %c0_i32, %c0_i32_0 : i32, i32
  }
  func.func @transform_6(%arg0: i32) -> (i32, i32) {
    %c0_i32 = arith.constant 0 : i32
    %c0_i32_0 = arith.constant 0 : i32
    %c0_i32_1 = arith.constant 0 : i32
    return %c0_i32, %c0_i32_0 : i32, i32
  }
  func.func @transform_7(%arg0: i32) -> (i32, i32) {
    %c0_i32 = arith.constant 0 : i32
    %c0_i32_0 = arith.constant 0 : i32
    return %arg0, %c0_i32 : i32, i32
  }
}

</mosaic_0001>

<llo_original>
// kernel: tpu_custom_call.1
$region0: #{tpu_custom_call.1}
  #allocation0 [shape = 'u32[]', space=smem, size = 0x4, offset = 0x4, fixed_abs, tag = 'smem constant byte address 0x4 - core index']
  #allocation1 [shape = 'u32[144,128]{1,0:T(1,128)}', space=vmem, size = 0x12000, scoped, tag = 'internal scratch']
  %s0 = inlined_call_operand.vmem [shape: f32[8,64], index: 0, kind: input, shape index: {}]
  %s1 = inlined_call_operand.vmem [shape: bf16[64,128], index: 1, kind: input, shape index: {}]
  %s2 = inlined_call_operand.vmem [shape: bf16[128,64], index: 2, kind: input, shape index: {}]
  %s3 = inlined_call_operand.vmem [shape: bf16[64,768], index: 3, kind: input, shape index: {}]
  %s4 = inlined_call_operand.vmem [shape: bf16[256,128], index: 4, kind: input, shape index: {}]
  %s5 = inlined_call_operand.vmem [shape: bf16[704,4], index: 5, kind: input, shape index: {}]
  %s6 = inlined_call_operand.vmem [shape: f32[8,768], index: 6, kind: input, shape index: {}]
  %s7 = inlined_call_operand.hbm [shape: f32[8,8], index: 7, kind: output, shape index: {}]
  %s8 = sld [smem:[#allocation0]]
  $region38: #{tpu_custom_call.1} parent=0
    _
  %s10 = ssub.s32 1, %s8
  %s11 = scalar_select 0, %s10, %s8
  $region1: #{tpu_custom_call.1} parent=0
    #allocation2 [shape = 'u8[4096]{0}', space=vmem, size = 0x1000, scoped, tag = 'output window, operand 0, single buffered']
    #allocation3 [shape = 's32[1]{0}', space=sflag, size = 0x4, scoped, tag = 'scoped memory for tpu_custom_call.1']
    %12 = vsyncpa [#allocation3], 0
    // Predicated region
    $region2: #{tpu_custom_call.1} parent=1 // pred_check
      _
    $region3: #{tpu_custom_call.1} parent=1 // pred_check_branch
      %14 = sbr.rel (0) target = $region5
    $region4: #{tpu_custom_call.1} parent=1 // pred_region
      _
    $region5: #{tpu_custom_call.1} parent=1 // pred_fallthru
      _
    // Predicated region
    $region6: #{tpu_custom_call.1} parent=1 // pred_check
      _
    $region7: #{tpu_custom_call.1} parent=1 // pred_check_branch
      %16 = sbr.rel (0) target = $region9
    $region8: #{tpu_custom_call.1} parent=1 // pred_region
      _
    $region9: #{tpu_custom_call.1} parent=1 // pred_fallthru
      _
    // Predicated region
    $region10: #{tpu_custom_call.1} parent=1 // pred_check
      _
    $region11: #{tpu_custom_call.1} parent=1 // pred_check_branch
      %18 = sbr.rel (0) target = $region13
    $region12: #{tpu_custom_call.1} parent=1 // pred_region
      _
    $region13: #{tpu_custom_call.1} parent=1 // pred_fallthru
      _
    // Predicated region
    $region14: #{tpu_custom_call.1} parent=1 // pred_check
      _
    $region15: #{tpu_custom_call.1} parent=1 // pred_check_branch
      %20 = sbr.rel (0) target = $region17
    $region16: #{tpu_custom_call.1} parent=1 // pred_region
      _
    $region17: #{tpu_custom_call.1} parent=1 // pred_fallthru
      _
    // Predicated region
    $region18: #{tpu_custom_call.1} parent=1 // pred_check
      _
    $region19: #{tpu_custom_call.1} parent=1 // pred_check_branch
      %22 = sbr.rel (0) target = $region21
    $region20: #{tpu_custom_call.1} parent=1 // pred_region
      _
    $region21: #{tpu_custom_call.1} parent=1 // pred_fallthru
      _
    // Predicated region
    $region22: #{tpu_custom_call.1} parent=1 // pred_check
      _
    $region23: #{tpu_custom_call.1} parent=1 // pred_check_branch
      %24 = sbr.rel (0) target = $region25
    $region24: #{tpu_custom_call.1} parent=1 // pred_region
      _
    $region25: #{tpu_custom_call.1} parent=1 // pred_fallthru
      _
    // Predicated region
    $region26: #{tpu_custom_call.1} parent=1 // pred_check
      _
    $region27: #{tpu_custom_call.1} parent=1 // pred_check_branch
      %26 = sbr.rel (0) target = $region29
    $region28: #{tpu_custom_call.1} parent=1 // pred_region
      _
    $region29: #{tpu_custom_call.1} parent=1 // pred_fallthru
      _
    %v28 = vld [vmem:[%s0] sm:$0xff]
    %v29 = vpack.c.bf16 %v28, %v28
    %v30 = vld [vmem:[%s1] sm:$0xf]
    %v31 = vld [vmem:[%s1 + $0x4] sm:$0xf]
    %v32 = vld [vmem:[%s1 + $0x8] sm:$0xf]
    %v33 = vld [vmem:[%s1 + $0xc] sm:$0xf]
    %v34 = vld [vmem:[%s1 + $0x10] sm:$0xf]
    %v35 = vld [vmem:[%s1 + $0x14] sm:$0xf]
    %v36 = vld [vmem:[%s1 + $0x18] sm:$0xf]
    %v37 = vld [vmem:[%s1 + $0x1c] sm:$0xf]
    %v38 = vld [vmem:[%s6] ss:$0 sm:$0xff]
    %v47 = vunpack.c.l.b16 %v30
    %v48 = vunpack.c.l.b16 %v31
    %v49 = vunpack.c.l.b16 %v32
    %v50 = vunpack.c.l.b16 %v33
    %v51 = vunpack.c.l.b16 %v34
    %v52 = vunpack.c.l.b16 %v35
    %v53 = vunpack.c.l.b16 %v36
    %v54 = vunpack.c.l.b16 %v37
    %v55 = vpack.c.b16 %v48, %v47
    %v56 = vpack.c.b16 %v50, %v49
    %v57 = vpack.c.b16 %v52, %v51
    %v58 = vpack.c.b16 %v54, %v53
    %vm63 = vcmask 523264
    %v65 = vsel %vm63, %v29, 0
    %67 = vmatprep.subr.bf16.mxu0 0
    %68 = vmatpush1.bf16.msra.mxu0 %v55
    %69 = vmatprep.subr.bf16.mxu0 0
    %70 = vmatpush1.bf16.msra.mxu0 %v56
    %71 = vmatprep.subr.bf16.mxu0 0
    %72 = vmatpush1.bf16.msra.mxu0 %v57
    %73 = vmatprep.subr.bf16.mxu0 0
    %74 = vmatpush1.bf16.msra.mxu0 %v58
    %75 = vmatprep.subr.bf16.mxu0 0
    %76 = vmatpush1.bf16.msra.mxu0 0
    %77 = vmatprep.subr.bf16.mxu0 0
    %78 = vmatpush1.bf16.msra.mxu0 0
    %79 = vmatprep.subr.bf16.mxu0 0
    %80 = vmatpush1.bf16.msra.mxu0 0
    %81 = vmatprep.subr.bf16.mxu0 0
    %82 = vmatpush1.bf16.msra.mxu0 0
    %83 = vmatprep.subr.bf16.mxu0 0
    %84 = vmatpush1.bf16.msra.mxu0 0
    %85 = vmatprep.subr.bf16.mxu0 0
    %86 = vmatpush1.bf16.msra.mxu0 0
    %87 = vmatprep.subr.bf16.mxu0 0
    %88 = vmatpush1.bf16.msra.mxu0 0
    %89 = vmatprep.subr.bf16.mxu0 0
    %90 = vmatpush1.bf16.msra.mxu0 0
    %91 = vmatprep.subr.bf16.mxu0 0
    %92 = vmatpush1.bf16.msra.mxu0 0
    %93 = vmatprep.subr.bf16.mxu0 0
    %94 = vmatpush1.bf16.msra.mxu0 0
    %95 = vmatprep.subr.bf16.mxu0 0
    %96 = vmatpush1.bf16.msra.mxu0 0
    %97 = vmatprep.subr.bf16.mxu0 0
    %98 = vmatpush1.bf16.msra.mxu0 0
    %99 = vmatprep.mubr.bf16.mxu0 0
    %100 = vmatmul.mubr.bf16.gmra.mrb[0].mxu0 %v65
    %v101 = vpop.f32.mrb[0].mxu0
    %v102 = vadd.f32 %v38, %v101
    %v103 = vpop.f32.mrb[0].mxu0
    %v104 = vpop.f32.mrb[0].mxu0
    %v105 = vpop.f32.mrb[0].mxu0
    %106 = vdwg.mxu0
    %v107 = vmul.f32 %v102, 0.5
    %v108 = vmul.f32 %v102, 0.044715
    %v109 = vmul.f32 %v108, %v102
    %v110 = vmul.f32 %v109, %v102
    %v111 = vadd.f32 %v102, %v110
    %v112 = vmul.f32 %v111, 0.7978846
    %v113 = vtanh.pop %v112
    %v114 = vadd.f32 %v113, 1.0
    %v115 = vmul.f32 %v107, %v114
    %116 = vadd.xlane.f32.xlu0 %v115
    %v117 = vpop.xlane.xlu0 %116
    %v118 = vrcp.pop 128.0
    %v119 = vmul.f32 %v117, %v118
    %v120 = vmul.f32 %v115, %v115
    %121 = vadd.xlane.f32.xlu0 %v120
    %v122 = vpop.xlane.xlu0 %121
    %v123 = vmul.f32 %v122, %v118
    %v124 = vmul.f32 %v119, %v119
    %v125 = vsub.f32 %v123, %v124
    %v126 = vsub.f32 %v115, %v119
    %v127 = vadd.f32 %v125, 1e-05
    %v128 = vrsqrt.pop %v127
    %v129 = vmul.f32 %v126, %v128
    %v130 = vld [vmem:[%s6 + $0x1] ss:$0 sm:$0xff]
    %v131 = vmul.f32 %v129, %v130
    %v132 = vld [vmem:[%s6 + $0x2] ss:$0 sm:$0xff]
    %v133 = vadd.f32 %v131, %v132
    %v134 = vpack.c.bf16 %v133, %v133
    %v135 = vld [vmem:[%s2] sm:$0xf]
    %v136 = vld [vmem:[%s2 + $0x4] sm:$0xf]
    %v137 = vld [vmem:[%s2 + $0x8] sm:$0xf]
    %v138 = vld [vmem:[%s2 + $0xc] sm:$0xf]
    %v139 = vld [vmem:[%s2 + $0x10] sm:$0xf]
    %v140 = vld [vmem:[%s2 + $0x14] sm:$0xf]
    %v141 = vld [vmem:[%s2 + $0x18] sm:$0xf]
    %v142 = vld [vmem:[%s2 + $0x1c] sm:$0xf]
    %v143 = vld [vmem:[%s2 + $0x20] sm:$0xf]
    %v144 = vld [vmem:[%s2 + $0x24] sm:$0xf]
    %v145 = vld [vmem:[%s2 + $0x28] sm:$0xf]
    %v146 = vld [vmem:[%s2 + $0x2c] sm:$0xf]
    %v147 = vld [vmem:[%s2 + $0x30] sm:$0xf]
    %v148 = vld [vmem:[%s2 + $0x34] sm:$0xf]
    %v149 = vld [vmem:[%s2 + $0x38] sm:$0xf]
    %v150 = vld [vmem:[%s2 + $0x3c] sm:$0xf]
    %v151 = vld [vmem:[%s6 + $0x3] ss:$0 sm:$0xff]
    %v168 = vunpack.c.l.b16 %v135
    %v169 = vunpack.c.l.b16 %v136
    %v170 = vunpack.c.l.b16 %v137
    %v171 = vunpack.c.l.b16 %v138
    %v172 = vunpack.c.l.b16 %v139
    %v173 = vunpack.c.l.b16 %v140
    %v174 = vunpack.c.l.b16 %v141
    %v175 = vunpack.c.l.b16 %v142
    %v176 = vunpack.c.l.b16 %v143
    %v177 = vunpack.c.l.b16 %v144
    %v178 = vunpack.c.l.b16 %v145
    %v179 = vunpack.c.l.b16 %v146
    %v180 = vunpack.c.l.b16 %v147
    %v181 = vunpack.c.l.b16 %v148
    %v182 = vunpack.c.l.b16 %v149
    %v183 = vunpack.c.l.b16 %v150
    %v184 = vpack.c.b16 %v169, %v168
    %v185 = vpack.c.b16 %v171, %v170
    %v186 = vpack.c.b16 %v173, %v172
    %v187 = vpack.c.b16 %v175, %v174
    %v188 = vpack.c.b16 %v177, %v176
    %v189 = vpack.c.b16 %v179, %v178
    %v190 = vpack.c.b16 %v181, %v180
    %v191 = vpack.c.b16 %v183, %v182
    %200 = vmatprep.subr.bf16.mxu0 0
    %201 = vmatpush1.bf16.msra.mxu0 %v184
    %202 = vmatprep.subr.bf16.mxu0 0
    %203 = vmatpush1.bf16.msra.mxu0 %v185
    %204 = vmatprep.subr.bf16.mxu0 0
    %205 = vmatpush1.bf16.msra.mxu0 %v186
    %206 = vmatprep.subr.bf16.mxu0 0
    %207 = vmatpush1.bf16.msra.mxu0 %v187
    %208 = vmatprep.subr.bf16.mxu0 0
    %209 = vmatpush1.bf16.msra.mxu0 %v188
    %210 = vmatprep.subr.bf16.mxu0 0
    %211 = vmatpush1.bf16.msra.mxu0 %v189
    %212 = vmatprep.subr.bf16.mxu0 0
    %213 = vmatpush1.bf16.msra.mxu0 %v190
    %214 = vmatprep.subr.bf16.mxu0 0
    %215 = vmatpush1.bf16.msra.mxu0 %v191
    %216 = vmatprep.subr.bf16.mxu0 0
    %217 = vmatpush1.bf16.msra.mxu0 0
    %218 = vmatprep.subr.bf16.mxu0 0
    %219 = vmatpush1.bf16.msra.mxu0 0
    %220 = vmatprep.subr.bf16.mxu0 0
    %221 = vmatpush1.bf16.msra.mxu0 0
    %222 = vmatprep.subr.bf16.mxu0 0
    %223 = vmatpush1.bf16.msra.mxu0 0
    %224 = vmatprep.subr.bf16.mxu0 0
    %225 = vmatpush1.bf16.msra.mxu0 0
    %226 = vmatprep.subr.bf16.mxu0 0
    %227 = vmatpush1.bf16.msra.mxu0 0
    %228 = vmatprep.subr.bf16.mxu0 0
    %229 = vmatpush1.bf16.msra.mxu0 0
    %230 = vmatprep.subr.bf16.mxu0 0
    %231 = vmatpush1.bf16.msra.mxu0 0
    %232 = vmatprep.mubr.bf16.mxu0 0
    %233 = vmatmul.mubr.bf16.gmra.mrb[0].mxu0 %v134
    %v234 = vpop.f32.mrb[0].mxu0
    %v235 = vadd.f32 %v151, %v234
    %v236 = vpop.f32.mrb[0].mxu0
    %v237 = vpop.f32.mrb[0].mxu0
    %v238 = vpop.f32.mrb[0].mxu0
    %239 = vdwg.mxu0
    %v240 = vmul.f32 %v235, 0.5
    %v241 = vmul.f32 %v235, 0.044715
    %v242 = vmul.f32 %v241, %v235
    %v243 = vmul.f32 %v242, %v235
    %v244 = vadd.f32 %v235, %v243
    %v245 = vmul.f32 %v244, 0.7978846
    %v246 = vtanh.pop %v245
    %v247 = vadd.f32 %v246, 1.0
    %v248 = vmul.f32 %v240, %v247
    %v249 = vpack.c.bf16 %v248, %v248
    %v250 = vld [vmem:[%s3] sm:$0xff]
    %v251 = vld [vmem:[%s3 + $0x8] sm:$0xff]
    %v252 = vld [vmem:[%s3 + $0x10] sm:$0xff]
    %v253 = vld [vmem:[%s3 + $0x18] sm:$0xff]
    %v254 = vld [vmem:[%s3 + $0x20] sm:$0xff]
    %v255 = vld [vmem:[%s3 + $0x28] sm:$0xff]
    %v256 = vld [vmem:[%s3 + $0x30] sm:$0xff]
    %v257 = vld [vmem:[%s3 + $0x38] sm:$0xff]
    %v258 = vld [vmem:[%s3 + $0x40] sm:$0xff]
    %v259 = vld [vmem:[%s3 + $0x48] sm:$0xff]
    %v260 = vld [vmem:[%s3 + $0x50] sm:$0xff]
    %v261 = vld [vmem:[%s3 + $0x58] sm:$0xff]
    %v262 = vld [vmem:[%s3 + $0x60] sm:$0xff]
    %v263 = vld [vmem:[%s3 + $0x68] sm:$0xff]
    %v264 = vld [vmem:[%s3 + $0x70] sm:$0xff]
    %v265 = vld [vmem:[%s3 + $0x78] sm:$0xff]
    %v266 = vld [vmem:[%s3 + $0x80] sm:$0xff]
    %v267 = vld [vmem:[%s3 + $0x88] sm:$0xff]
    %v268 = vld [vmem:[%s3 + $0x90] sm:$0xff]
    %v269 = vld [vmem:[%s3 + $0x98] sm:$0xff]
    %v270 = vld [vmem:[%s3 + $0xa0] sm:$0xff]
    %v271 = vld [vmem:[%s3 + $0xa8] sm:$0xff]
    %v272 = vld [vmem:[%s3 + $0xb0] sm:$0xff]
    %v273 = vld [vmem:[%s3 + $0xb8] sm:$0xff]
    %s274 = scalar_lea.vmem %s6, 4
    %v275 = vld [vmem:[%s274] ss:$8 sm:$0xf]
    %v276 = vld [vmem:[%s274] ss:$8 sm:$0x30]
    %v277 = vor.u32 %v275, %v276
    %v279 = vlaneseq
    %v280 = vshrl.u32 %v279, 7
    %v281 = vsub.s32 0, %v280
    %v282 = vrot.slane %v277, %v281
    %v283 = vlaneseq
    %v284 = vshrl.u32 %v283, 7
    %v285 = vsub.s32 1, %v284
    %v286 = vrot.slane %v277, %v285
    %v287 = vlaneseq
    %v288 = vshrl.u32 %v287, 7
    %v289 = vsub.s32 2, %v288
    %v290 = vrot.slane %v277, %v289
    %v291 = vlaneseq
    %v292 = vshrl.u32 %v291, 7
    %v293 = vsub.s32 3, %v292
    %v294 = vrot.slane %v277, %v293
    %v295 = vlaneseq
    %v296 = vshrl.u32 %v295, 7
    %v297 = vsub.s32 4, %v296
    %v298 = vrot.slane %v277, %v297
    %v299 = vlaneseq
    %v300 = vshrl.u32 %v299, 7
    %v301 = vsub.s32 5, %v300
    %v302 = vrot.slane %v277, %v301
    %v333 = vunpack.c.l.b16 %v250
    %v334 = vunpack.c.h.b16 %v250
    %v335 = vunpack.c.l.b16 %v251
    %v336 = vunpack.c.h.b16 %v251
    %v337 = vunpack.c.l.b16 %v252
    %v338 = vunpack.c.h.b16 %v252
    %v339 = vunpack.c.l.b16 %v253
    %v340 = vunpack.c.h.b16 %v253
    %v341 = vunpack.c.l.b16 %v254
    %v342 = vunpack.c.h.b16 %v254
    %v343 = vunpack.c.l.b16 %v255
    %v344 = vunpack.c.h.b16 %v255
    %v345 = vunpack.c.l.b16 %v256
    %v346 = vunpack.c.h.b16 %v256
    %v347 = vunpack.c.l.b16 %v257
    %v348 = vunpack.c.h.b16 %v257
    %v349 = vunpack.c.l.b16 %v258
    %v350 = vunpack.c.h.b16 %v258
    %v351 = vunpack.c.l.b16 %v259
    %v352 = vunpack.c.h.b16 %v259
    %v353 = vunpack.c.l.b16 %v260
    %v354 = vunpack.c.h.b16 %v260
    %v355 = vunpack.c.l.b16 %v261
    %v356 = vunpack.c.h.b16 %v261
    %v357 = vunpack.c.l.b16 %v262
    %v358 = vunpack.c.h.b16 %v262
    %v359 = vunpack.c.l.b16 %v263
    %v360 = vunpack.c.h.b16 %v263
    %v361 = vunpack.c.l.b16 %v264
    %v362 = vunpack.c.h.b16 %v264
    %v363 = vunpack.c.l.b16 %v265
    %v364 = vunpack.c.h.b16 %v265
    %v365 = vunpack.c.l.b16 %v266
    %v366 = vunpack.c.h.b16 %v266
    %v367 = vunpack.c.l.b16 %v267
    %v368 = vunpack.c.h.b16 %v267
    %v369 = vunpack.c.l.b16 %v268
    %v370 = vunpack.c.h.b16 %v268
    %v371 = vunpack.c.l.b16 %v269
    %v372 = vunpack.c.h.b16 %v269
    %v373 = vunpack.c.l.b16 %v270
    %v374 = vunpack.c.h.b16 %v270
    %v375 = vunpack.c.l.b16 %v271
    %v376 = vunpack.c.h.b16 %v271
    %v377 = vunpack.c.l.b16 %v272
    %v378 = vunpack.c.h.b16 %v272
    %v379 = vunpack.c.l.b16 %v273
    %v380 = vunpack.c.h.b16 %v273
    %v381 = vpack.c.b16 %v339, %v333
    %v382 = vpack.c.b16 %v340, %v334
    %v383 = vpack.c.b16 %v341, %v335
    %v384 = vpack.c.b16 %v342, %v336
    %v385 = vpack.c.b16 %v343, %v337
    %v386 = vpack.c.b16 %v344, %v338
    %v387 = vpack.c.b16 %v351, %v345
    %v388 = vpack.c.b16 %v352, %v346
    %v389 = vpack.c.b16 %v353, %v347
    %v390 = vpack.c.b16 %v354, %v348
    %v391 = vpack.c.b16 %v355, %v349
    %v392 = vpack.c.b16 %v356, %v350
    %v393 = vpack.c.b16 %v363, %v357
    %v394 = vpack.c.b16 %v364, %v358
    %v395 = vpack.c.b16 %v365, %v359
    %v396 = vpack.c.b16 %v366, %v360
    %v397 = vpack.c.b16 %v367, %v361
    %v398 = vpack.c.b16 %v368, %v362
    %v399 = vpack.c.b16 %v375, %v369
    %v400 = vpack.c.b16 %v376, %v370
    %v401 = vpack.c.b16 %v377, %v371
    %v402 = vpack.c.b16 %v378, %v372
    %v403 = vpack.c.b16 %v379, %v373
    %v404 = vpack.c.b16 %v380, %v374
    %v430 = vsel %vm63, %v249, 0
    %432 = vmatprep.subr.bf16.mxu0 %v382
    %433 = vmatpush1.bf16.msra.mxu0 %v381
    %434 = vmatprep.subr.bf16.mxu0 %v388
    %435 = vmatpush1.bf16.msra.mxu0 %v387
    %436 = vmatprep.subr.bf16.mxu0 %v394
    %437 = vmatpush1.bf16.msra.mxu0 %v393
    %438 = vmatprep.subr.bf16.mxu0 %v400
    %439 = vmatpush1.bf16.msra.mxu0 %v399
    %440 = vmatprep.subr.bf16.mxu0 0
    %441 = vmatpush1.bf16.msra.mxu0 0
    %442 = vmatprep.subr.bf16.mxu0 0
    %443 = vmatpush1.bf16.msra.mxu0 0
    %444 = vmatprep.subr.bf16.mxu0 0
    %445 = vmatpush1.bf16.msra.mxu0 0
    %446 = vmatprep.subr.bf16.mxu0 0
    %447 = vmatpush1.bf16.msra.mxu0 0
    %448 = vmatprep.subr.bf16.mxu0 0
    %449 = vmatpush1.bf16.msra.mxu0 0
    %450 = vmatprep.subr.bf16.mxu0 0
    %451 = vmatpush1.bf16.msra.mxu0 0
    %452 = vmatprep.subr.bf16.mxu0 0
    %453 = vmatpush1.bf16.msra.mxu0 0
    %454 = vmatprep.subr.bf16.mxu0 0
    %455 = vmatpush1.bf16.msra.mxu0 0
    %456 = vmatprep.subr.bf16.mxu0 0
    %457 = vmatpush1.bf16.msra.mxu0 0
    %458 = vmatprep.subr.bf16.mxu0 0
    %459 = vmatpush1.bf16.msra.mxu0 0
    %460 = vmatprep.subr.bf16.mxu0 0
    %461 = vmatpush1.bf16.msra.mxu0 0
    %462 = vmatprep.subr.bf16.mxu0 0
    %463 = vmatpush1.bf16.msra.mxu0 0
    %464 = vmatprep.mubr.bf16.mxu0 0
    %465 = vmatmul.mubr.bf16.gmra.mrb[0].mxu0 %v430
    %v466 = vpop.f32.mrb[0].mxu0
    %v467 = vadd.f32 %v282, %v466
    %v468 = vpop.f32.mrb[0].mxu0
    %v469 = vadd.f32 %v286, %v468
    %v470 = vpop.f32.mrb[0].mxu0
    %v471 = vpop.f32.mrb[0].mxu0
    %472 = vdwg.mxu0
    %473 = vmatprep.subr.bf16.mxu0 %v384
    %474 = vmatpush1.bf16.msra.mxu0 %v383
    %475 = vmatprep.subr.bf16.mxu0 %v390
    %476 = vmatpush1.bf16.msra.mxu0 %v389
    %477 = vmatprep.subr.bf16.mxu0 %v396
    %478 = vmatpush1.bf16.msra.mxu0 %v395
    %479 = vmatprep.subr.bf16.mxu0 %v402
    %480 = vmatpush1.bf16.msra.mxu0 %v401
    %481 = vmatprep.subr.bf16.mxu0 0
    %482 = vmatpush1.bf16.msra.mxu0 0
    %483 = vmatprep.subr.bf16.mxu0 0
    %484 = vmatpush1.bf16.msra.mxu0 0
    %485 = vmatprep.subr.bf16.mxu0 0
    %486 = vmatpush1.bf16.msra.mxu0 0
    %487 = vmatprep.subr.bf16.mxu0 0
    %488 = vmatpush1.bf16.msra.mxu0 0
    %489 = vmatprep.subr.bf16.mxu0 0
    %490 = vmatpush1.bf16.msra.mxu0 0
    %491 = vmatprep.subr.bf16.mxu0 0
    %492 = vmatpush1.bf16.msra.mxu0 0
    %493 = vmatprep.subr.bf16.mxu0 0
    %494 = vmatpush1.bf16.msra.mxu0 0
    %495 = vmatprep.subr.bf16.mxu0 0
    %496 = vmatpush1.bf16.msra.mxu0 0
    %497 = vmatprep.subr.bf16.mxu0 0
    %498 = vmatpush1.bf16.msra.mxu0 0
    %499 = vmatprep.subr.bf16.mxu0 0
    %500 = vmatpush1.bf16.msra.mxu0 0
    %501 = vmatprep.subr.bf16.mxu0 0
    %502 = vmatpush1.bf16.msra.mxu0 0
    %503 = vmatprep.subr.bf16.mxu0 0
    %504 = vmatpush1.bf16.msra.mxu0 0
    %505 = vmatprep.mubr.bf16.mxu0 0
    %506 = vmatmul.mubr.bf16.gmra.mrb[0].mxu0 %v430
    %v507 = vpop.f32.mrb[0].mxu0
    %v508 = vadd.f32 %v290, %v507
    %v509 = vpop.f32.mrb[0].mxu0
    %v510 = vadd.f32 %v294, %v509
    %v511 = vpop.f32.mrb[0].mxu0
    %v512 = vpop.f32.mrb[0].mxu0
    %513 = vdwg.mxu0
    %514 = vmatprep.subr.bf16.mxu0 %v386
    %515 = vmatpush1.bf16.msra.mxu0 %v385
    %516 = vmatprep.subr.bf16.mxu0 %v392
    %517 = vmatpush1.bf16.msra.mxu0 %v391
    %518 = vmatprep.subr.bf16.mxu0 %v398
    %519 = vmatpush1.bf16.msra.mxu0 %v397
    %520 = vmatprep.subr.bf16.mxu0 %v404
    %521 = vmatpush1.bf16.msra.mxu0 %v403
    %522 = vmatprep.subr.bf16.mxu0 0
    %523 = vmatpush1.bf16.msra.mxu0 0
    %524 = vmatprep.subr.bf16.mxu0 0
    %525 = vmatpush1.bf16.msra.mxu0 0
    %526 = vmatprep.subr.bf16.mxu0 0
    %527 = vmatpush1.bf16.msra.mxu0 0
    %528 = vmatprep.subr.bf16.mxu0 0
    %529 = vmatpush1.bf16.msra.mxu0 0
    %530 = vmatprep.subr.bf16.mxu0 0
    %531 = vmatpush1.bf16.msra.mxu0 0
    %532 = vmatprep.subr.bf16.mxu0 0
    %533 = vmatpush1.bf16.msra.mxu0 0
    %534 = vmatprep.subr.bf16.mxu0 0
    %535 = vmatpush1.bf16.msra.mxu0 0
    %536 = vmatprep.subr.bf16.mxu0 0
    %537 = vmatpush1.bf16.msra.mxu0 0
    %538 = vmatprep.subr.bf16.mxu0 0
    %539 = vmatpush1.bf16.msra.mxu0 0
    %540 = vmatprep.subr.bf16.mxu0 0
    %541 = vmatpush1.bf16.msra.mxu0 0
    %542 = vmatprep.subr.bf16.mxu0 0
    %543 = vmatpush1.bf16.msra.mxu0 0
    %544 = vmatprep.subr.bf16.mxu0 0
    %545 = vmatpush1.bf16.msra.mxu0 0
    %546 = vmatprep.mubr.bf16.mxu0 0
    %547 = vmatmul.mubr.bf16.gmra.mrb[0].mxu0 %v430
    %v548 = vpop.f32.mrb[0].mxu0
    %v549 = vadd.f32 %v298, %v548
    %v550 = vpop.f32.mrb[0].mxu0
    %v551 = vadd.f32 %v302, %v550
    %v552 = vpop.f32.mrb[0].mxu0
    %v553 = vpop.f32.mrb[0].mxu0
    %554 = vdwg.mxu0
    %v555 = vtanh.pop %v467
    %v556 = vtanh.pop %v469
    %v557 = vxor.u32 %v508, 2147483648
    %v558 = vxor.u32 %v510, 2147483648
    %v559 = vmul.f32 %v557, 1.442695
    %v560 = vpow.pop %v559
    %v561 = vmul.f32 %v558, 1.442695
    %v562 = vpow.pop %v561
    %v563 = vadd.f32 %v560, 1.0
    %v564 = vadd.f32 %v562, 1.0
    %v565 = vrcp.pop %v563
    %v566 = vmul.f32 1.0, %v565
    %v567 = vrcp.pop %v564
    %v568 = vmul.f32 1.0, %v567
    %v569 = vmul.f32 %v549, 0.5
    %v570 = vmul.f32 %v551, 0.5
    %v571 = vmul.f32 %v549, 0.044715
    %v572 = vmul.f32 %v551, 0.044715
    %v573 = vmul.f32 %v571, %v549
    %v574 = vmul.f32 %v572, %v551
    %v575 = vmul.f32 %v573, %v549
    %v576 = vmul.f32 %v574, %v551
    %v577 = vadd.f32 %v549, %v575
    %v578 = vadd.f32 %v551, %v576
    %v579 = vmul.f32 %v577, 0.7978846
    %v580 = vmul.f32 %v578, 0.7978846
    %v581 = vtanh.pop %v579
    %v582 = vtanh.pop %v580
    %v583 = vadd.f32 %v581, 1.0
    %v584 = vadd.f32 %v582, 1.0
    %v585 = vmul.f32 %v569, %v583
    %v586 = vmul.f32 %v570, %v584
    %v587 = vpack.c.bf16 %v555, %v555
    %v588 = vpack.c.bf16 %v556, %v556
    %v589 = vld [vmem:[%s4] sm:$0xf]
    %v590 = vld [vmem:[%s4 + $0x4] sm:$0xf]
    %v591 = vld [vmem:[%s4 + $0x8] sm:$0xf]
    %v592 = vld [vmem:[%s4 + $0xc] sm:$0xf]
    %v593 = vld [vmem:[%s4 + $0x10] sm:$0xf]
    %v594 = vld [vmem:[%s4 + $0x14] sm:$0xf]
    %v595 = vld [vmem:[%s4 + $0x18] sm:$0xf]
    %v596 = vld [vmem:[%s4 + $0x1c] sm:$0xf]
    %v597 = vld [vmem:[%s4 + $0x20] sm:$0xf]
    %v598 = vld [vmem:[%s4 + $0x24] sm:$0xf]
    %v599 = vld [vmem:[%s4 + $0x28] sm:$0xf]
    %v600 = vld [vmem:[%s4 + $0x2c] sm:$0xf]
    %v601 = vld [vmem:[%s4 + $0x30] sm:$0xf]
    %v602 = vld [vmem:[%s4 + $0x34] sm:$0xf]
    %v603 = vld [vmem:[%s4 + $0x38] sm:$0xf]
    %v604 = vld [vmem:[%s4 + $0x3c] sm:$0xf]
    %v605 = vld [vmem:[%s4 + $0x40] sm:$0xf]
    %v606 = vld [vmem:[%s4 + $0x44] sm:$0xf]
    %v607 = vld [vmem:[%s4 + $0x48] sm:$0xf]
    %v608 = vld [vmem:[%s4 + $0x4c] sm:$0xf]
    %v609 = vld [vmem:[%s4 + $0x50] sm:$0xf]
    %v610 = vld [vmem:[%s4 + $0x54] sm:$0xf]
    %v611 = vld [vmem:[%s4 + $0x58] sm:$0xf]
    %v612 = vld [vmem:[%s4 + $0x5c] sm:$0xf]
    %v613 = vld [vmem:[%s4 + $0x60] sm:$0xf]
    %v614 = vld [vmem:[%s4 + $0x64] sm:$0xf]
    %v615 = vld [vmem:[%s4 + $0x68] sm:$0xf]
    %v616 = vld [vmem:[%s4 + $0x6c] sm:$0xf]
    %v617 = vld [vmem:[%s4 + $0x70] sm:$0xf]
    %v618 = vld [vmem:[%s4 + $0x74] sm:$0xf]
    %v619 = vld [vmem:[%s4 + $0x78] sm:$0xf]
    %v620 = vld [vmem:[%s4 + $0x7c] sm:$0xf]
    %v621 = vld [vmem:[%s6 + $0x5] ss:$0 sm:$0xff]
    %v654 = vunpack.c.l.b16 %v589
    %v655 = vunpack.c.l.b16 %v590
    %v656 = vunpack.c.l.b16 %v591
    %v657 = vunpack.c.l.b16 %v592
    %v658 = vunpack.c.l.b16 %v593
    %v659 = vunpack.c.l.b16 %v594
    %v660 = vunpack.c.l.b16 %v595
    %v661 = vunpack.c.l.b16 %v596
    %v662 = vunpack.c.l.b16 %v597
    %v663 = vunpack.c.l.b16 %v598
    %v664 = vunpack.c.l.b16 %v599
    %v665 = vunpack.c.l.b16 %v600
    %v666 = vunpack.c.l.b16 %v601
    %v667 = vunpack.c.l.b16 %v602
    %v668 = vunpack.c.l.b16 %v603
    %v669 = vunpack.c.l.b16 %v604
    %v670 = vunpack.c.l.b16 %v605
    %v671 = vunpack.c.l.b16 %v606
    %v672 = vunpack.c.l.b16 %v607
    %v673 = vunpack.c.l.b16 %v608
    %v674 = vunpack.c.l.b16 %v609
    %v675 = vunpack.c.l.b16 %v610
    %v676 = vunpack.c.l.b16 %v611
    %v677 = vunpack.c.l.b16 %v612
    %v678 = vunpack.c.l.b16 %v613
    %v679 = vunpack.c.l.b16 %v614
    %v680 = vunpack.c.l.b16 %v615
    %v681 = vunpack.c.l.b16 %v616
    %v682 = vunpack.c.l.b16 %v617
    %v683 = vunpack.c.l.b16 %v618
    %v684 = vunpack.c.l.b16 %v619
    %v685 = vunpack.c.l.b16 %v620
    %v686 = vpack.c.b16 %v655, %v654
    %v687 = vpack.c.b16 %v657, %v656
    %v688 = vpack.c.b16 %v659, %v658
    %v689 = vpack.c.b16 %v661, %v660
    %v690 = vpack.c.b16 %v663, %v662
    %v691 = vpack.c.b16 %v665, %v664
    %v692 = vpack.c.b16 %v667, %v666
    %v693 = vpack.c.b16 %v669, %v668
    %v694 = vpack.c.b16 %v671, %v670
    %v695 = vpack.c.b16 %v673, %v672
    %v696 = vpack.c.b16 %v675, %v674
    %v697 = vpack.c.b16 %v677, %v676
    %v698 = vpack.c.b16 %v679, %v678
    %v699 = vpack.c.b16 %v681, %v680
    %v700 = vpack.c.b16 %v683, %v682
    %v701 = vpack.c.b16 %v685, %v684
    %718 = vmatprep.subr.bf16.mxu0 0
    %719 = vmatpush1.bf16.msra.mxu0 %v686
    %720 = vmatprep.subr.bf16.mxu0 0
    %721 = vmatpush1.bf16.msra.mxu0 %v687
    %722 = vmatprep.subr.bf16.mxu0 0
    %723 = vmatpush1.bf16.msra.mxu0 %v688
    %724 = vmatprep.subr.bf16.mxu0 0
    %725 = vmatpush1.bf16.msra.mxu0 %v689
    %726 = vmatprep.subr.bf16.mxu0 0
    %727 = vmatpush1.bf16.msra.mxu0 %v690
    %728 = vmatprep.subr.bf16.mxu0 0
    %729 = vmatpush1.bf16.msra.mxu0 %v691
    %730 = vmatprep.subr.bf16.mxu0 0
    %731 = vmatpush1.bf16.msra.mxu0 %v692
    %732 = vmatprep.subr.bf16.mxu0 0
    %733 = vmatpush1.bf16.msra.mxu0 %v693
    %734 = vmatprep.subr.bf16.mxu0 0
    %735 = vmatpush1.bf16.msra.mxu0 %v694
    %736 = vmatprep.subr.bf16.mxu0 0
    %737 = vmatpush1.bf16.msra.mxu0 %v695
    %738 = vmatprep.subr.bf16.mxu0 0
    %739 = vmatpush1.bf16.msra.mxu0 %v696
    %740 = vmatprep.subr.bf16.mxu0 0
    %741 = vmatpush1.bf16.msra.mxu0 %v697
    %742 = vmatprep.subr.bf16.mxu0 0
    %743 = vmatpush1.bf16.msra.mxu0 %v698
    %744 = vmatprep.subr.bf16.mxu0 0
    %745 = vmatpush1.bf16.msra.mxu0 %v699
    %746 = vmatprep.subr.bf16.mxu0 0
    %747 = vmatpush1.bf16.msra.mxu0 %v700
    %748 = vmatprep.subr.bf16.mxu0 0
    %749 = vmatpush1.bf16.msra.mxu0 %v701
    %750 = vmatprep.mubr.bf16.mxu0 %v588
    %751 = vmatmul.mubr.bf16.gmra.mrb[0].mxu0 %v587
    %v752 = vpop.f32.mrb[0].mxu0
    %v753 = vadd.f32 %v621, %v752
    %v754 = vpop.f32.mrb[0].mxu0
    %v755 = vpop.f32.mrb[0].mxu0
    %v756 = vpop.f32.mrb[0].mxu0
    %757 = vdwg.mxu0
    %v758 = vmax.f32 %v753, 0.0
    %v759 = vpack.c.bf16 %v758, %v758
    %v760 = vpack.c.bf16 %v566, %v566
    %v761 = vpack.c.bf16 %v568, %v568
    %v762 = vpack.c.bf16 %v585, %v585
    %v763 = vpack.c.bf16 %v586, %v586
    %v764 = vld [vmem:[%s5] sm:$0xf]
    %v765 = vld [vmem:[%s5 + $0x4] sm:$0xf]
    %v766 = vld [vmem:[%s5 + $0x8] sm:$0xf]
    %v767 = vld [vmem:[%s5 + $0xc] sm:$0xf]
    %v768 = vld [vmem:[%s5 + $0x10] sm:$0xf]
    %v769 = vld [vmem:[%s5 + $0x14] sm:$0xf]
    %v770 = vld [vmem:[%s5 + $0x18] sm:$0xf]
    %v771 = vld [vmem:[%s5 + $0x1c] sm:$0xf]
    %v772 = vld [vmem:[%s5 + $0x20] sm:$0xf]
    %v773 = vld [vmem:[%s5 + $0x24] sm:$0xf]
    %v774 = vld [vmem:[%s5 + $0x28] sm:$0xf]
    %v775 = vld [vmem:[%s5 + $0x2c] sm:$0xf]
    %v776 = vld [vmem:[%s5 + $0x30] sm:$0xf]
    %v777 = vld [vmem:[%s5 + $0x34] sm:$0xf]
    %v778 = vld [vmem:[%s5 + $0x38] sm:$0xf]
    %v779 = vld [vmem:[%s5 + $0x3c] sm:$0xf]
    %v780 = vld [vmem:[%s5 + $0x40] sm:$0xf]
    %v781 = vld [vmem:[%s5 + $0x44] sm:$0xf]
    %v782 = vld [vmem:[%s5 + $0x48] sm:$0xf]
    %v783 = vld [vmem:[%s5 + $0x4c] sm:$0xf]
    %v784 = vld [vmem:[%s5 + $0x50] sm:$0xf]
    %v785 = vld [vmem:[%s5 + $0x54] sm:$0xf]
    %v786 = vld [vmem:[%s5 + $0x58] sm:$0xf]
    %v787 = vld [vmem:[%s5 + $0x5c] sm:$0xf]
    %v788 = vld [vmem:[%s5 + $0x60] sm:$0xf]
    %v789 = vld [vmem:[%s5 + $0x64] sm:$0xf]
    %v790 = vld [vmem:[%s5 + $0x68] sm:$0xf]
    %v791 = vld [vmem:[%s5 + $0x6c] sm:$0xf]
    %v792 = vld [vmem:[%s5 + $0x70] sm:$0xf]
    %v793 = vld [vmem:[%s5 + $0x74] sm:$0xf]
    %v794 = vld [vmem:[%s5 + $0x78] sm:$0xf]
    %v795 = vld [vmem:[%s5 + $0x7c] sm:$0xf]
    %v796 = vld [vmem:[%s5 + $0x80] sm:$0xf]
    %v797 = vld [vmem:[%s5 + $0x84] sm:$0xf]
    %v798 = vld [vmem:[%s5 + $0x88] sm:$0xf]
    %v799 = vld [vmem:[%s5 + $0x8c] sm:$0xf]
    %v800 = vld [vmem:[%s5 + $0x90] sm:$0xf]
    %v801 = vld [vmem:[%s5 + $0x94] sm:$0xf]
    %v802 = vld [vmem:[%s5 + $0x98] sm:$0xf]
    %v803 = vld [vmem:[%s5 + $0x9c] sm:$0xf]
    %v804 = vld [vmem:[%s5 + $0xa0] sm:$0xf]
    %v805 = vld [vmem:[%s5 + $0xa4] sm:$0xf]
    %v806 = vld [vmem:[%s5 + $0xa8] sm:$0xf]
    %v807 = vld [vmem:[%s5 + $0xac] sm:$0xf]
    %v808 = vld [vmem:[%s5 + $0xb0] sm:$0xf]
    %v809 = vld [vmem:[%s5 + $0xb4] sm:$0xf]
    %v810 = vld [vmem:[%s5 + $0xb8] sm:$0xf]
    %v811 = vld [vmem:[%s5 + $0xbc] sm:$0xf]
    %v812 = vld [vmem:[%s5 + $0xc0] sm:$0xf]
    %v813 = vld [vmem:[%s5 + $0xc4] sm:$0xf]
    %v814 = vld [vmem:[%s5 + $0xc8] sm:$0xf]
    %v815 = vld [vmem:[%s5 + $0xcc] sm:$0xf]
    %v816 = vld [vmem:[%s5 + $0xd0] sm:$0xf]
    %v817 = vld [vmem:[%s5 + $0xd4] sm:$0xf]
    %v818 = vld [vmem:[%s5 + $0xd8] sm:$0xf]
    %v819 = vld [vmem:[%s5 + $0xdc] sm:$0xf]
    %v820 = vld [vmem:[%s5 + $0xe0] sm:$0xf]
    %v821 = vld [vmem:[%s5 + $0xe4] sm:$0xf]
    %v822 = vld [vmem:[%s5 + $0xe8] sm:$0xf]
    %v823 = vld [vmem:[%s5 + $0xec] sm:$0xf]
    %v824 = vld [vmem:[%s5 + $0xf0] sm:$0xf]
    %v825 = vld [vmem:[%s5 + $0xf4] sm:$0xf]
    %v826 = vld [vmem:[%s5 + $0xf8] sm:$0xf]
    %v827 = vld [vmem:[%s5 + $0xfc] sm:$0xf]
    %v828 = vld [vmem:[%s5 + $0x100] sm:$0xf]
    %v829 = vld [vmem:[%s5 + $0x104] sm:$0xf]
    %v830 = vld [vmem:[%s5 + $0x108] sm:$0xf]
    %v831 = vld [vmem:[%s5 + $0x10c] sm:$0xf]
    %v832 = vld [vmem:[%s5 + $0x110] sm:$0xf]
    %v833 = vld [vmem:[%s5 + $0x114] sm:$0xf]
    %v834 = vld [vmem:[%s5 + $0x118] sm:$0xf]
    %v835 = vld [vmem:[%s5 + $0x11c] sm:$0xf]
    %v836 = vld [vmem:[%s5 + $0x120] sm:$0xf]
    %v837 = vld [vmem:[%s5 + $0x124] sm:$0xf]
    %v838 = vld [vmem:[%s5 + $0x128] sm:$0xf]
    %v839 = vld [vmem:[%s5 + $0x12c] sm:$0xf]
    %v840 = vld [vmem:[%s5 + $0x130] sm:$0xf]
    %v841 = vld [vmem:[%s5 + $0x134] sm:$0xf]
    %v842 = vld [vmem:[%s5 + $0x138] sm:$0xf]
    %v843 = vld [vmem:[%s5 + $0x13c] sm:$0xf]
    %v844 = vld [vmem:[%s5 + $0x140] sm:$0xf]
    %v845 = vld [vmem:[%s5 + $0x144] sm:$0xf]
    %v846 = vld [vmem:[%s5 + $0x148] sm:$0xf]
    %v847 = vld [vmem:[%s5 + $0x14c] sm:$0xf]
    %v848 = vld [vmem:[%s5 + $0x150] sm:$0xf]
    %v849 = vld [vmem:[%s5 + $0x154] sm:$0xf]
    %v850 = vld [vmem:[%s5 + $0x158] sm:$0xf]
    %v851 = vld [vmem:[%s5 + $0x15c] sm:$0xf]
    %v852 = vld [vmem:[%s6 + $0x6] ss:$0 sm:$0xff]
    %v941 = vunpack.c.l.b16 %v764
    %v942 = vunpack.c.l.b16 %v765
    %v943 = vunpack.c.l.b16 %v766
    %v944 = vunpack.c.l.b16 %v767
    %v945 = vunpack.c.l.b16 %v768
    %v946 = vunpack.c.l.b16 %v769
    %v947 = vunpack.c.l.b16 %v770
    %v948 = vunpack.c.l.b16 %v771
    %v949 = vunpack.c.l.b16 %v772
    %v950 = vunpack.c.l.b16 %v773
    %v951 = vunpack.c.l.b16 %v774
    %v952 = vunpack.c.l.b16 %v775
    %v953 = vunpack.c.l.b16 %v776
    %v954 = vunpack.c.l.b16 %v777
    %v955 = vunpack.c.l.b16 %v778
    %v956 = vunpack.c.l.b16 %v779
    %v957 = vunpack.c.l.b16 %v780
    %v958 = vunpack.c.l.b16 %v781
    %v959 = vunpack.c.l.b16 %v782
    %v960 = vunpack.c.l.b16 %v783
    %v961 = vunpack.c.l.b16 %v784
    %v962 = vunpack.c.l.b16 %v785
    %v963 = vunpack.c.l.b16 %v786
    %v964 = vunpack.c.l.b16 %v787
    %v965 = vunpack.c.l.b16 %v788
    %v966 = vunpack.c.l.b16 %v789
    %v967 = vunpack.c.l.b16 %v790
    %v968 = vunpack.c.l.b16 %v791
    %v969 = vunpack.c.l.b16 %v792
    %v970 = vunpack.c.l.b16 %v793
    %v971 = vunpack.c.l.b16 %v794
    %v972 = vunpack.c.l.b16 %v795
    %v973 = vunpack.c.l.b16 %v796
    %v974 = vunpack.c.l.b16 %v797
    %v975 = vunpack.c.l.b16 %v798
    %v976 = vunpack.c.l.b16 %v799
    %v977 = vunpack.c.l.b16 %v800
    %v978 = vunpack.c.l.b16 %v801
    %v979 = vunpack.c.l.b16 %v802
    %v980 = vunpack.c.l.b16 %v803
    %v981 = vunpack.c.l.b16 %v804
    %v982 = vunpack.c.l.b16 %v805
    %v983 = vunpack.c.l.b16 %v806
    %v984 = vunpack.c.l.b16 %v807
    %v985 = vunpack.c.l.b16 %v808
    %v986 = vunpack.c.l.b16 %v809
    %v987 = vunpack.c.l.b16 %v810
    %v988 = vunpack.c.l.b16 %v811
    %v989 = vunpack.c.l.b16 %v812
    %v990 = vunpack.c.l.b16 %v813
    %v991 = vunpack.c.l.b16 %v814
    %v992 = vunpack.c.l.b16 %v815
    %v993 = vunpack.c.l.b16 %v816
    %v994 = vunpack.c.l.b16 %v817
    %v995 = vunpack.c.l.b16 %v818
    %v996 = vunpack.c.l.b16 %v819
    %v997 = vunpack.c.l.b16 %v820
    %v998 = vunpack.c.l.b16 %v821
    %v999 = vunpack.c.l.b16 %v822
    %v1000 = vunpack.c.l.b16 %v823
    %v1001 = vunpack.c.l.b16 %v824
    %v1002 = vunpack.c.l.b16 %v825
    %v1003 = vunpack.c.l.b16 %v826
    %v1004 = vunpack.c.l.b16 %v827
    %v1005 = vunpack.c.l.b16 %v828
    %v1006 = vunpack.c.l.b16 %v829
    %v1007 = vunpack.c.l.b16 %v830
    %v1008 = vunpack.c.l.b16 %v831
    %v1009 = vunpack.c.l.b16 %v832
    %v1010 = vunpack.c.l.b16 %v833
    %v1011 = vunpack.c.l.b16 %v834
    %v1012 = vunpack.c.l.b16 %v835
    %v1013 = vunpack.c.l.b16 %v836
    %v1014 = vunpack.c.l.b16 %v837
    %v1015 = vunpack.c.l.b16 %v838
    %v1016 = vunpack.c.l.b16 %v839
    %v1017 = vunpack.c.l.b16 %v840
    %v1018 = vunpack.c.l.b16 %v841
    %v1019 = vunpack.c.l.b16 %v842
    %v1020 = vunpack.c.l.b16 %v843
    %v1021 = vunpack.c.l.b16 %v844
    %v1022 = vunpack.c.l.b16 %v845
    %v1023 = vunpack.c.l.b16 %v846
    %v1024 = vunpack.c.l.b16 %v847
    %v1025 = vunpack.c.l.b16 %v848
    %v1026 = vunpack.c.l.b16 %v849
    %v1027 = vunpack.c.l.b16 %v850
    %v1028 = vunpack.c.l.b16 %v851
    %v1029 = vpack.c.b16 %v942, %v941
    %v1030 = vpack.c.b16 %v944, %v943
    %v1031 = vpack.c.b16 %v946, %v945
    %v1032 = vpack.c.b16 %v948, %v947
    %v1033 = vpack.c.b16 %v950, %v949
    %v1034 = vpack.c.b16 %v952, %v951
    %v1035 = vpack.c.b16 %v954, %v953
    %v1036 = vpack.c.b16 %v956, %v955
    %v1037 = vpack.c.b16 %v958, %v957
    %v1038 = vpack.c.b16 %v960, %v959
    %v1039 = vpack.c.b16 %v962, %v961
    %v1040 = vpack.c.b16 %v964, %v963
    %v1041 = vpack.c.b16 %v966, %v965
    %v1042 = vpack.c.b16 %v968, %v967
    %v1043 = vpack.c.b16 %v970, %v969
    %v1044 = vpack.c.b16 %v972, %v971
    %v1045 = vpack.c.b16 %v974, %v973
    %v1046 = vpack.c.b16 %v976, %v975
    %v1047 = vpack.c.b16 %v978, %v977
    %v1048 = vpack.c.b16 %v980, %v979
    %v1049 = vpack.c.b16 %v982, %v981
    %v1050 = vpack.c.b16 %v984, %v983
    %v1051 = vpack.c.b16 %v986, %v985
    %v1052 = vpack.c.b16 %v988, %v987
    %v1053 = vpack.c.b16 %v990, %v989
    %v1054 = vpack.c.b16 %v992, %v991
    %v1055 = vpack.c.b16 %v994, %v993
    %v1056 = vpack.c.b16 %v996, %v995
    %v1057 = vpack.c.b16 %v998, %v997
    %v1058 = vpack.c.b16 %v1000, %v999
    %v1059 = vpack.c.b16 %v1002, %v1001
    %v1060 = vpack.c.b16 %v1004, %v1003
    %v1061 = vpack.c.b16 %v1006, %v1005
    %v1062 = vpack.c.b16 %v1008, %v1007
    %v1063 = vpack.c.b16 %v1010, %v1009
    %v1064 = vpack.c.b16 %v1012, %v1011
    %v1065 = vpack.c.b16 %v1014, %v1013
    %v1066 = vpack.c.b16 %v1016, %v1015
    %v1067 = vpack.c.b16 %v1018, %v1017
    %v1068 = vpack.c.b16 %v1020, %v1019
    %v1069 = vpack.c.b16 %v1022, %v1021
    %v1070 = vpack.c.b16 %v1024, %v1023
    %v1071 = vpack.c.b16 %v1026, %v1025
    %v1072 = vpack.c.b16 %v1028, %v1027
    %1117 = vmatprep.subr.bf16.mxu0 0
    %1118 = vmatpush1.bf16.msra.mxu0 %v1029
    %1119 = vmatprep.subr.bf16.mxu0 0
    %1120 = vmatpush1.bf16.msra.mxu0 %v1030
    %1121 = vmatprep.subr.bf16.mxu0 0
    %1122 = vmatpush1.bf16.msra.mxu0 %v1031
    %1123 = vmatprep.subr.bf16.mxu0 0
    %1124 = vmatpush1.bf16.msra.mxu0 %v1032
    %1125 = vmatprep.subr.bf16.mxu0 0
    %1126 = vmatpush1.bf16.msra.mxu0 %v1033
    %1127 = vmatprep.subr.bf16.mxu0 0
    %1128 = vmatpush1.bf16.msra.mxu0 %v1034
    %1129 = vmatprep.subr.bf16.mxu0 0
    %1130 = vmatpush1.bf16.msra.mxu0 %v1035
    %1131 = vmatprep.subr.bf16.mxu0 0
    %1132 = vmatpush1.bf16.msra.mxu0 %v1036
    %1133 = vmatprep.subr.bf16.mxu0 0
    %1134 = vmatpush1.bf16.msra.mxu0 %v1037
    %1135 = vmatprep.subr.bf16.mxu0 0
    %1136 = vmatpush1.bf16.msra.mxu0 %v1038
    %1137 = vmatprep.subr.bf16.mxu0 0
    %1138 = vmatpush1.bf16.msra.mxu0 %v1039
    %1139 = vmatprep.subr.bf16.mxu0 0
    %1140 = vmatpush1.bf16.msra.mxu0 %v1040
    %1141 = vmatprep.subr.bf16.mxu0 0
    %1142 = vmatpush1.bf16.msra.mxu0 %v1041
    %1143 = vmatprep.subr.bf16.mxu0 0
    %1144 = vmatpush1.bf16.msra.mxu0 %v1042
    %1145 = vmatprep.subr.bf16.mxu0 0
    %1146 = vmatpush1.bf16.msra.mxu0 %v1043
    %1147 = vmatprep.subr.bf16.mxu0 0
    %1148 = vmatpush1.bf16.msra.mxu0 %v1044
    %1149 = vmatprep.mubr.bf16.mxu0 %v760
    %1150 = vmatmul.mubr.bf16.gmra.mrb[0].mxu0 %v759
    %v1151 = vpop.f32.mrb[0].mxu0
    %v1152 = vadd.f32 %v852, %v1151
    %v1153 = vpop.f32.mrb[0].mxu0
    %v1154 = vpop.f32.mrb[0].mxu0
    %v1155 = vpop.f32.mrb[0].mxu0
    %1156 = vdwg.mxu0
    %1157 = vmatprep.subr.bf16.mxu0 0
    %1158 = vmatpush1.bf16.msra.mxu0 %v1045
    %1159 = vmatprep.subr.bf16.mxu0 0
    %1160 = vmatpush1.bf16.msra.mxu0 %v1046
    %1161 = vmatprep.subr.bf16.mxu0 0
    %1162 = vmatpush1.bf16.msra.mxu0 %v1047
    %1163 = vmatprep.subr.bf16.mxu0 0
    %1164 = vmatpush1.bf16.msra.mxu0 %v1048
    %1165 = vmatprep.subr.bf16.mxu0 0
    %1166 = vmatpush1.bf16.msra.mxu0 %v1049
    %1167 = vmatprep.subr.bf16.mxu0 0
    %1168 = vmatpush1.bf16.msra.mxu0 %v1050
    %1169 = vmatprep.subr.bf16.mxu0 0
    %1170 = vmatpush1.bf16.msra.mxu0 %v1051
    %1171 = vmatprep.subr.bf16.mxu0 0
    %1172 = vmatpush1.bf16.msra.mxu0 %v1052
    %1173 = vmatprep.subr.bf16.mxu0 0
    %1174 = vmatpush1.bf16.msra.mxu0 %v1053
    %1175 = vmatprep.subr.bf16.mxu0 0
    %1176 = vmatpush1.bf16.msra.mxu0 %v1054
    %1177 = vmatprep.subr.bf16.mxu0 0
    %1178 = vmatpush1.bf16.msra.mxu0 %v1055
    %1179 = vmatprep.subr.bf16.mxu0 0
    %1180 = vmatpush1.bf16.msra.mxu0 %v1056
    %1181 = vmatprep.subr.bf16.mxu0 0
    %1182 = vmatpush1.bf16.msra.mxu0 %v1057
    %1183 = vmatprep.subr.bf16.mxu0 0
    %1184 = vmatpush1.bf16.msra.mxu0 %v1058
    %1185 = vmatprep.subr.bf16.mxu0 0
    %1186 = vmatpush1.bf16.msra.mxu0 %v1059
    %1187 = vmatprep.subr.bf16.mxu0 0
    %1188 = vmatpush1.bf16.msra.mxu0 %v1060
    %1189 = vmatprep.mubr.bf16.mxu0 %v762
    %1190 = vmatmul.mubr.bf16.gmra.mrb[0].mxu0 %v761
    %v1191 = vpop.f32.mrb[0].mxu0
    %v1192 = vadd.f32 %v1152, %v1191
    %v1193 = vpop.f32.mrb[0].mxu0
    %v1194 = vpop.f32.mrb[0].mxu0
    %v1195 = vpop.f32.mrb[0].mxu0
    %1196 = vdwg.mxu0
    %1197 = vmatprep.subr.bf16.mxu0 0
    %1198 = vmatpush1.bf16.msra.mxu0 %v1061
    %1199 = vmatprep.subr.bf16.mxu0 0
    %1200 = vmatpush1.bf16.msra.mxu0 %v1062
    %1201 = vmatprep.subr.bf16.mxu0 0
    %1202 = vmatpush1.bf16.msra.mxu0 %v1063
    %1203 = vmatprep.subr.bf16.mxu0 0
    %1204 = vmatpush1.bf16.msra.mxu0 %v1064
    %1205 = vmatprep.subr.bf16.mxu0 0
    %1206 = vmatpush1.bf16.msra.mxu0 %v1065
    %1207 = vmatprep.subr.bf16.mxu0 0
    %1208 = vmatpush1.bf16.msra.mxu0 %v1066
    %1209 = vmatprep.subr.bf16.mxu0 0
    %1210 = vmatpush1.bf16.msra.mxu0 %v1067
    %1211 = vmatprep.subr.bf16.mxu0 0
    %1212 = vmatpush1.bf16.msra.mxu0 %v1068
    %1213 = vmatprep.subr.bf16.mxu0 0
    %1214 = vmatpush1.bf16.msra.mxu0 %v1069
    %1215 = vmatprep.subr.bf16.mxu0 0
    %1216 = vmatpush1.bf16.msra.mxu0 %v1070
    %1217 = vmatprep.subr.bf16.mxu0 0
    %1218 = vmatpush1.bf16.msra.mxu0 %v1071
    %1219 = vmatprep.subr.bf16.mxu0 0
    %1220 = vmatpush1.bf16.msra.mxu0 %v1072
    %1221 = vmatprep.subr.bf16.mxu0 0
    %1222 = vmatpush1.bf16.msra.mxu0 0
    %1223 = vmatprep.subr.bf16.mxu0 0
    %1224 = vmatpush1.bf16.msra.mxu0 0
    %1225 = vmatprep.subr.bf16.mxu0 0
    %1226 = vmatpush1.bf16.msra.mxu0 0
    %1227 = vmatprep.subr.bf16.mxu0 0
    %1228 = vmatpush1.bf16.msra.mxu0 0
    %1229 = vmatprep.mubr.bf16.mxu0 %v430
    %1230 = vmatmul.mubr.bf16.gmra.mrb[0].mxu0 %v763
    %v1231 = vpop.f32.mrb[0].mxu0
    %v1232 = vadd.f32 %v1192, %v1231
    %v1233 = vpop.f32.mrb[0].mxu0
    %v1234 = vpop.f32.mrb[0].mxu0
    %v1235 = vpop.f32.mrb[0].mxu0
    %1236 = vdwg.mxu0
    %v1237 = vmul.f32 %v1232, 1.618034
    %v1238 = vxor.u32 %v1237, 2147483648
    %v1239 = vmul.f32 %v1238, 1.442695
    %v1240 = vpow.pop %v1239
    %v1241 = vadd.f32 %v1240, 1.0
    %v1242 = vrcp.pop %v1241
    %v1243 = vmul.f32 1.0, %v1242
    %v1244 = vmax.f32 %v1232, 0.0
    %v1245 = vand.u32 2147483647, %v1232
    %v1246 = vsub.f32 0.0, %v1245
    %v1247 = vmul.f32 %v1246, 1.442695
    %v1248 = vpow.pop %v1247
    %v1249 = vadd.f32 %v1248, 1.0
    %v1250 = vlog2.pop %v1249
    %v1251 = vmul.f32 %v1250, 0.6931472
    %v1252 = vadd.f32 %v1244, %v1251
    %v1253 = vxor.u32 %v1232, 2147483648
    %v1254 = vmul.f32 %v1253, 1.442695
    %v1255 = vpow.pop %v1254
    %v1256 = vadd.f32 %v1255, 1.0
    %v1257 = vrcp.pop %v1256
    %v1258 = vmul.f32 1.0, %v1257
    %1260 = vrot.lane.b32.xlu0 %v1243, 127
    %v1261 = vpop.permute.xlu0 %1260
    %v1263 = vmul.f32 %v1243, %v1261
    %v1264 = vsub.f32 1.0, %v1263
    %1266 = vrot.lane.b32.xlu0 %v1264, 5
    %v1267 = vpop.permute.xlu0 %1266
    %vm1269 = vcmask 15360
    %v1270 = vsel %vm1269, %v1243, %v1252
    %vm1271 = vcmask 23552
    %v1272 = vsel %vm1271, %v1270, %v1258
    %vm1273 = vcmask 31744
    %v1274 = vsel %vm1273, %v1272, 1.0
    %vm1275 = vcmask 39936
    %v1276 = vsel %vm1275, %v1274, %v1267
    %vm1277 = vcmask 48128
    %v1278 = vsel %vm1277, %v1276, 0.0
    %vm1279 = vcmask 64512
    %1280 = vst.msk [vmem:[#allocation2] sm:$0xff] %vm1279, %v1278
    // Predicated region
    $region30: #{tpu_custom_call.1} parent=1 // pred_check
      _
    $region31: #{tpu_custom_call.1} parent=1 // pred_check_branch
      %1282 = sbr.rel (0) target = $region33
    $region32: #{tpu_custom_call.1} parent=1 // pred_region
      %s1284 = ssub.s32 128, 128
      %1285 = vsyncadd [#allocation3], %s1284
      %s1287 = sshll.u32 [#allocation2], 4
      %s1288 = int_to_ptr.vmem [resolvable:$true] %s1287
      %1290 = dma.vmem_to_hbm [thread:$0]  %s1288, 128, %s7, [#allocation3]
    $region33: #{tpu_custom_call.1} parent=1 // pred_fallthru
      _
    // Predicated region
    $region34: #{tpu_custom_call.1} parent=1 // pred_check
      _
    $region35: #{tpu_custom_call.1} parent=1 // pred_check_branch
      %1292 = sbr.rel (0) target = $region37
    $region36: #{tpu_custom_call.1} parent=1 // pred_region
      %1293 = dma.done [#allocation3], 128
    $region37: #{tpu_custom_call.1} parent=1 // pred_fallthru
      _
    %1294 = vsyncpa [#allocation3], 1

</llo_original>
